<compile_context>
chip_gen: v7x
topology: tpu7x:2x2x1
jax: 0.10.0
libtpu: 0.0.40
codegen_flags: <defaults>
</compile_context>

<pallas_src>
import math
from functools import partial

import jax
import jax.numpy as jnp
from jax.experimental import pallas as pl
from jax.experimental.pallas import tpu as pltpu

_MIB = 1 << 20
_FOLD_MAX_BATCH = 32


def _build_pe(embedding_dim: int, max_len: int = 5000, freq: float = 10000.0) -> jnp.ndarray:
    """Deterministic sinusoidal positional-embedding buffer, matching torch init."""
    assert embedding_dim % 2 == 0, "sinusoidal PE requires an even embedding_dim"
    position = jnp.arange(0, max_len, dtype=jnp.float32)[:, None]              # (L, 1)
    div = jnp.exp(jnp.arange(0, embedding_dim, 2, dtype=jnp.float32)
                  * (-math.log(freq) / embedding_dim))                         # (D/2,)
    pe = jnp.zeros((max_len, embedding_dim), dtype=jnp.float32)
    pe = pe.at[:, 0::2].set(jnp.sin(position * div))
    pe = pe.at[:, 1::2].set(jnp.cos(position * div))
    # torch: pe.unsqueeze(0).transpose(0, 1) -> (max_len, 1, embedding_dim)
    return pe[:, None, :]


# ----------------------------------------------------------------------------- kernels

def _add_folded_kernel(x_ref, pe_ref, o_ref, *, batch):
    """x_ref/o_ref: (TS, B*D) lane/sublane-dense; pe_ref: (TS, D) compact.

    Replicate PE across the batch ONCE per tile (lane concat) and emit a single
    full-width store (no per-batch masked partial stores).
    """
    pe = pe_ref[...].astype(jnp.float32)                                # (TS, D)
    pe_rep = pe if batch == 1 else jnp.concatenate([pe] * batch, axis=-1)
    o_ref[...] = (x_ref[...].astype(jnp.float32) + pe_rep).astype(o_ref.dtype)


def _add_bcast_kernel(x_ref, pe_ref, o_ref):
    """x_ref/o_ref: (TS, TB, D); pe_ref: (TS, 1, D) -- VPU broadcast add over batch."""
    acc = x_ref[...].astype(jnp.float32) + pe_ref[...].astype(jnp.float32)
    o_ref[...] = acc.astype(o_ref.dtype)


# ----------------------------------------------------------------------------- planning

def _sublane_quantum(itemsize: int) -> int:
    """Row-alignment quantum: 8 for f32, 16 for bf16, 32 for int8/fp8 (packed rows)."""
    return max(8, 32 // max(1, itemsize))


def _vmem_targets():
    """(target x-block bytes, cap on per-step working set, vmem_limit ceiling)."""
    try:
        kind = jax.devices()[0].device_kind.lower()
    except Exception:  # pragma: no cover - defensive
        kind = ""
    if "v7" in kind:   # 64 MiB physical VMEM per TensorCore, ~3.2 TB/s HBM
        return 6 * _MIB, 40 * _MIB, 52 * _MIB
    if "v6" in kind:   # 128 MiB physical, ~1.4 TB/s HBM
        return 4 * _MIB, 80 * _MIB, 100 * _MIB
    return 2 * _MIB, 80 * _MIB, 100 * _MIB   # v5e & older / unknown: conservative


def _folded_ws_per_row(B, D, itemsize):
    """Per-seq-row VMEM: 2x(x + out + pe) double-buffered + f32 in-kernel temporaries."""
    row = B * D * itemsize
    return 2 * (2 * row + D * 4) + 2 * B * D * 4


def _batched_ws_per_row(tb, D, itemsize):
    row = tb * D * itemsize
    return 2 * (2 * row + D * 4) + 2 * tb * D * 4


# ----------------------------------------------------------------------------- wrapper

@partial(jax.jit, static_argnames=("tile_rows", "mode"))
def positional_embedding_forward(x: jnp.ndarray, pe: jnp.ndarray, *,
                                 tile_rows: int | None = None,
                                 mode: str | None = None) -> jnp.ndarray:
    """x: (seq_len, batch, embedding_dim); pe: (max_len, 1, embedding_dim) f32 buffer."""
    assert x.ndim == 3, "expected (seq_len, batch, embedding_dim)"
    S, B, D = x.shape
    assert pe.ndim == 3 and pe.shape[1] == 1 and pe.shape[2] == D and pe.shape[0] >= S

    itemsize = jnp.dtype(x.dtype).itemsize
    q = _sublane_quantum(itemsize)
    target, cap, limit_ceiling = _vmem_targets()

    def round_rows(ts):
        ts = max(1, min(int(ts), S))
        if ts < S:
            ts = min(S, max(q, (ts // q) * q))   # dtype-aware sublane alignment
        return ts

    if mode is None:
        fits = _folded_ws_per_row(B, D, itemsize) * min(q, S) <= cap
        mode = "folded" if (B <= _FOLD_MAX_BATCH and fits) else "batched"

    if mode == "folded":
        per_row = _folded_ws_per_row(B, D, itemsize)
        row_bytes = B * D * itemsize
        ts = round_rows(tile_rows if tile_rows is not None
                        else max(q, target // max(1, row_bytes)))
        ts = min(ts, round_rows(max(q, cap // per_row)))          # VMEM-budget guard
        vmem_limit = int(min(ts * per_row + 8 * _MIB, limit_ceiling))

        x2 = x.reshape(S, B * D)   # metadata-only under jit (row-major layout)
        out = pl.pallas_call(
            partial(_add_folded_kernel, batch=B),
            out_shape=jax.ShapeDtypeStruct((S, B * D), x.dtype),
            grid=(pl.cdiv(S, ts),),
            in_specs=[
                pl.BlockSpec((ts, B * D), lambda i: (i, 0)),
                # raw (max_len, 1, D) pe buffer: BlockSpec selects rows and
                # squeezes the singleton dim -- no per-call slice/cast in HBM.
                pl.BlockSpec((ts, None, D), lambda i: (i, 0, 0)),
            ],
            out_specs=pl.BlockSpec((ts, B * D), lambda i: (i, 0)),
            compiler_params=pltpu.CompilerParams(
                dimension_semantics=("parallel",),
                vmem_limit_bytes=vmem_limit),
        )(x2, pe)
        return out.reshape(S, B, D)

    # ---- batched 3-D fallback: large B or rows too wide for the folded layout ----
    if q * B * D * itemsize <= target:
        tb = B                                              # full batch per block
    else:
        tb = min(B, max(q, (target // (q * D * itemsize)) // q * q))
    per_row = _batched_ws_per_row(tb, D, itemsize)
    if tile_rows is not None:
        ts = round_rows(tile_rows)
    else:
        ts = max(1, min(S, target // max(1, tb * D * itemsize)))
        if ts < S and ts >= q:
            ts = (ts // q) * q
    ts = max(1, min(ts, max(1, cap // per_row)))            # VMEM-budget guard
    vmem_limit = int(min(ts * per_row + 8 * _MIB, limit_ceiling))
    # TODO(synk): also tile the lane (D) axis when even a (1, q, D) block overflows VMEM.

    out = pl.pallas_call(
        _add_bcast_kernel,
        out_shape=jax.ShapeDtypeStruct((S, B, D), x.dtype),
        grid=(pl.cdiv(S, ts), pl.cdiv(B, tb)),
        in_specs=[
            pl.BlockSpec((ts, tb, D), lambda i, j: (i, j, 0)),
            pl.BlockSpec((ts, 1, D), lambda i, j: (i, 0, 0)),
        ],
        out_specs=pl.BlockSpec((ts, tb, D), lambda i, j: (i, j, 0)),
        compiler_params=pltpu.CompilerParams(
            dimension_semantics=("parallel", "parallel"),
            vmem_limit_bytes=vmem_limit),
    )(x, pe)
    return out


# ----------------------------------------------------------------------------- demo / check

if __name__ == "__main__":
    # Primary small example (mirrors the PyTorch module's convention: seq-first).
    embedding_dim = 32
    max_len = 64
    seq_len = 8
    batch = 2

    key = jax.random.PRNGKey(0)
    x = jax.random.normal(key, (seq_len, batch, embedding_dim), dtype=jnp.float32)
    pe = _build_pe(embedding_dim, max_len=max_len, freq=10000.0)

    out = jax.block_until_ready(positional_embedding_forward(x, pe))
    ref = x + pe[:seq_len]
    assert out.shape == (seq_len, batch, embedding_dim)
    assert jnp.allclose(out, ref, atol=1e-6, rtol=1e-6)

    # Extra sanity checks: multi-tile grids with a ragged last tile, B == 1,
    # the batched 3-D path, and a bf16 input (dtype-aware tiling + f32 accumulate).
    checks = [
        ((20, 1, 128), jnp.float32, 8, None),
        ((24, 4, 128), jnp.float32, 8, None),
        ((20, 40, 128), jnp.float32, 8, "batched"),
        ((16, 2, 128), jnp.bfloat16, None, None),
    ]
    for (S2, B2, D2), dt, tr, md in checks:
        k2 = jax.random.PRNGKey(0)
        x2 = jax.random.normal(k2, (S2, B2, D2), dtype=jnp.float32).astype(dt)
        pe2 = _build_pe(D2, max_len=64)
        o2 = jax.block_until_ready(
            positional_embedding_forward(x2, pe2, tile_rows=tr, mode=md))
        ref2 = (x2.astype(jnp.float32) + pe2[:S2]).astype(dt)
        tol = 3e-2 if dt == jnp.bfloat16 else 1e-6
        assert o2.shape == (S2, B2, D2)
        assert jnp.allclose(o2.astype(jnp.float32), ref2.astype(jnp.float32), atol=tol)

    print("KERNEL_OK")
</pallas_src>

<mosaic_0001>
module attributes {stable_mosaic.version = 11 : i64} {
  func.func @_add_folded_kernel(%arg0: i32, %arg1: memref<8x64xf32, #tpu.memory_space<vmem>>, %arg2: memref<8x1x32xf32, #tpu.memory_space<vmem>>, %arg3: memref<8x64xf32, #tpu.memory_space<vmem>>) attributes {dimension_semantics = [#tpu.dimension_semantics<parallel>], iteration_bounds = array<i64: 1>, scalar_prefetch = 0 : i64, scratch_operands = 0 : i64, tpu.core_type = #tpu.core_type<tc>, window_params = [{transform_indices = @transform_0, window_bounds = array<i64: 8, 64>}, {transform_indices = @transform_1, window_bounds = array<i64: 8, 1, 32>}, {transform_indices = @transform_2, window_bounds = array<i64: 8, 64>}]} {
    %c0 = arith.constant 0 : index
    %c0_0 = arith.constant 0 : index
    %c0_1 = arith.constant 0 : index
    %0 = vector.load %arg2[%c0, %c0_0, %c0_1] : memref<8x1x32xf32, #tpu.memory_space<vmem>>, vector<8x1x32xf32>
    %1 = vector.shape_cast %0 : vector<8x1x32xf32> to vector<8x32xf32>
    %2 = tpu.concatenate %1, %1 in 1 : vector<8x32xf32>, vector<8x32xf32> -> vector<8x64xf32>
    %c0_2 = arith.constant 0 : index
    %c0_3 = arith.constant 0 : index
    %3 = vector.load %arg1[%c0_2, %c0_3] : memref<8x64xf32, #tpu.memory_space<vmem>>, vector<8x64xf32>
    %4 = arith.addf %3, %2 : vector<8x64xf32>
    %c0_4 = arith.constant 0 : index
    %c0_5 = arith.constant 0 : index
    %5 = vector.load %arg3[%c0_4, %c0_5] : memref<8x64xf32, #tpu.memory_space<vmem>>, vector<8x64xf32>
    tpu.vector_store %arg3[%c0_4, %c0_5], %4 {strides = array<i32>} : memref<8x64xf32, #tpu.memory_space<vmem>>, vector<8x64xf32>,
    return
  }
  func.func @transform_0(%arg0: i32) -> (i32, i32) {
    %c0_i32 = arith.constant 0 : i32
    %c0_i32_0 = arith.constant 0 : i32
    return %arg0, %c0_i32 : i32, i32
  }
  func.func @transform_1(%arg0: i32) -> (i32, i32, i32) {
    %c0_i32 = arith.constant 0 : i32
    %c0_i32_0 = arith.constant 0 : i32
    %c0_i32_1 = arith.constant 0 : i32
    return %arg0, %c0_i32, %c0_i32_0 : i32, i32, i32
  }
  func.func @transform_2(%arg0: i32) -> (i32, i32) {
    %c0_i32 = arith.constant 0 : i32
    %c0_i32_0 = arith.constant 0 : i32
    return %arg0, %c0_i32 : i32, i32
  }
}

</mosaic_0001>

<llo_original>
// kernel: positional_embedding_forward.1
$region0: #{positional_embedding_forward.1}
  #allocation0 [shape = 'u32[]', space=smem, size = 0x4, offset = 0x4, fixed_abs, tag = 'smem constant byte address 0x4 - core index']
  #allocation1 [shape = 'u32[144,128]{1,0:T(1,128)}', space=vmem, size = 0x12000, scoped, tag = 'internal scratch']
  %s0 = inlined_call_operand.vmem [shape: f32[8,64], index: 0, kind: input, shape index: {}]
  %s1 = inlined_call_operand.vmem [shape: f32[64,1,32], index: 1, kind: input, shape index: {}]
  %s2 = inlined_call_operand.vmem [shape: f32[8,64], index: 2, kind: output, shape index: {}]
  %s3 = sld [smem:[#allocation0]]
  $region18: #{positional_embedding_forward.1} parent=0
    _
  %s5 = ssub.s32 1, %s3
  %s6 = scalar_select 0, %s5, %s3
  // Predicated region
  $region2: #{positional_embedding_forward.1} parent=0 // pred_check
    _
  $region3: #{positional_embedding_forward.1} parent=0 // pred_check_branch
    %8 = sbr.rel (0) target = $region5
  $region4: #{positional_embedding_forward.1} parent=0 // pred_region
    _
  $region5: #{positional_embedding_forward.1} parent=0 // pred_fallthru
    _
  // Predicated region
  $region6: #{positional_embedding_forward.1} parent=0 // pred_check
    _
  $region7: #{positional_embedding_forward.1} parent=0 // pred_check_branch
    %10 = sbr.rel (0) target = $region9
  $region8: #{positional_embedding_forward.1} parent=0 // pred_region
    _
  $region9: #{positional_embedding_forward.1} parent=0 // pred_fallthru
    _
  %v11 = vld [vmem:[%s1] sm:$0x1]
  %v12 = vld [vmem:[%s1 + $0x1] sm:$0x1]
  %v13 = vld [vmem:[%s1 + $0x2] sm:$0x1]
  %v14 = vld [vmem:[%s1 + $0x3] sm:$0x1]
  %v15 = vld [vmem:[%s1 + $0x4] sm:$0x1]
  %v16 = vld [vmem:[%s1 + $0x5] sm:$0x1]
  %v17 = vld [vmem:[%s1 + $0x6] sm:$0x1]
  %v18 = vld [vmem:[%s1 + $0x7] sm:$0x1]
  %v27 = vcombine.low %v11, %v12
  %v28 = vcombine.low %v13, %v14
  %v29 = vcombine.low %v15, %v16
  %v30 = vcombine.low %v17, %v18
  %v32 = vunpack.c.l.s4 1966171168
  %v33 = vunpack.c.0.s8 %v32
  %v34 = vlaneseq
  %v35 = vshrl.u32 %v34, 7
  %v36 = vsub.s32 %v33, %v35
  %v37 = vrot.slane %v27, %v36
  %v39 = vunpack.c.l.s4 1966171168
  %v40 = vunpack.c.0.s8 %v39
  %v41 = vlaneseq
  %v42 = vshrl.u32 %v41, 7
  %v43 = vsub.s32 %v40, %v42
  %v44 = vrot.slane %v28, %v43
  %v46 = vunpack.c.l.s4 1966171168
  %v47 = vunpack.c.0.s8 %v46
  %v48 = vlaneseq
  %v49 = vshrl.u32 %v48, 7
  %v50 = vsub.s32 %v47, %v49
  %v51 = vrot.slane %v29, %v50
  %v53 = vunpack.c.l.s4 1966171168
  %v54 = vunpack.c.0.s8 %v53
  %v55 = vlaneseq
  %v56 = vshrl.u32 %v55, 7
  %v57 = vsub.s32 %v54, %v56
  %v58 = vrot.slane %v30, %v57
  %v59 = vcombine.low %v37, %v44
  %v60 = vcombine.low %v51, %v58
  %v62 = vunpack.c.l.s4 1966171168
  %v63 = vunpack.c.0.s8 %v62
  %v64 = vlaneseq
  %v65 = vshrl.u32 %v64, 7
  %v66 = vsub.s32 %v63, %v65
  %v67 = vrot.slane %v59, %v66
  %v69 = vunpack.c.l.s4 1966171168
  %v70 = vunpack.c.0.s8 %v69
  %v71 = vlaneseq
  %v72 = vshrl.u32 %v71, 7
  %v73 = vsub.s32 %v70, %v72
  %v74 = vrot.slane %v60, %v73
  %v75 = vcombine.low %v67, %v74
  %77 = vrot.lane.b32.xlu0 %v75, 32
  %v78 = vpop.permute.xlu0 %77
  %vm80 = vcmask 261120
  %v81 = vsel %vm80, %v75, %v78
  %v82 = vld [vmem:[%s0] sm:$0xff]
  %v83 = vadd.f32 %v82, %v81
  %vm84 = vcmask 523264
  %85 = vst.msk [vmem:[%s2] sm:$0xff] %vm84, %v83
  // Predicated region
  $region10: #{positional_embedding_forward.1} parent=0 // pred_check
    _
  $region11: #{positional_embedding_forward.1} parent=0 // pred_check_branch
    %87 = sbr.rel (0) target = $region13
  $region12: #{positional_embedding_forward.1} parent=0 // pred_region
    _
  $region13: #{positional_embedding_forward.1} parent=0 // pred_fallthru
    _
  // Predicated region
  $region14: #{positional_embedding_forward.1} parent=0 // pred_check
    _
  $region15: #{positional_embedding_forward.1} parent=0 // pred_check_branch
    %89 = sbr.rel (0) target = $region17
  $region16: #{positional_embedding_forward.1} parent=0 // pred_region
    _
  $region17: #{positional_embedding_forward.1} parent=0 // pred_fallthru
    _

</llo_original>
